<compile_context>
chip_gen: v6e
topology: v6e:2x2x1
jax: 0.10.0
libtpu: 0.0.40
codegen_flags: <defaults>
</compile_context>

<pallas_src>
import functools

import jax
import jax.numpy as jnp
from jax import lax
from jax.experimental import pallas as pl
from jax.experimental.pallas import tpu as pltpu


def _round_up(x, m):
    return (x + m - 1) // m * m


def _pick_row_tile(ho, wo):
    # Smallest row-tile height TH that divides Ho, is sublane friendly (TH % 8 == 0)
    # and gives a lane-dense spatial tile (TH*Wo a multiple of 128). Falls back to Ho.
    for th in range(8, ho + 1, 8):
        if ho % th == 0 and th * wo >= 128 and (th * wo) % 128 == 0:
            return th
    return ho


def conv_stats_kernel(x_ref, w_ref, y_ref, sum_ref, ssq_ref, patch_ref, *, KH, KW):
    # x_ref:     (1, 1, TH+KH-1, Wp, C)  bf16 padded-input row slab (incl. KH-1 halo rows)
    # w_ref:     (O8, KH*KW*C)           bf16 im2col-packed weights (O rounded up to 8)
    # y_ref:     (1, 1, O8, TH*Wo)       bf16 conv tile, spatial on the 128-lane axis
    # sum_ref:   (1, 1, O8, 1)           f32 per-channel partial sum for BN
    # ssq_ref:   (1, 1, O8, 1)           f32 per-channel partial sum of squares
    # patch_ref: (TH, Wo, KH*KW*C)       bf16 VMEM scratch holding the im2col patch
    _, _, SH, WP, C = x_ref.shape
    TH, WO = SH - KH + 1, WP - KW + 1

    slab = x_ref[0, 0]                                         # (SH, Wp, C)

    # Assemble the im2col patch with simple static slice stores (no in-kernel concat).
    # TODO(synk): the KH*KW shifted-window slices still relayout through VMEM; a halo-aware
    # manual DMA per tap would remove these copies for very wide feature maps.
    for kh in range(KH):                                       # small static unroll
        for kw in range(KW):
            j = kh * KW + kw
            patch_ref[:, :, j * C:(j + 1) * C] = slab[kh:kh + TH, kw:kw + WO, :]

    patch = patch_ref[...].reshape(TH * WO, KH * KW * C)       # (M, K) — lanes unchanged

    # Single transposed GEMM: (O8, K) x (M, K)^T -> (O8, M); spatial stays on lanes so the
    # y stores are unmasked without padding O to 128.  bf16 operands, f32 accumulation.
    acc = lax.dot_general(w_ref[...], patch,
                          dimension_numbers=(((1,), (1,)), ((), ())),
                          preferred_element_type=jnp.float32)

    y_ref[0, 0] = acc.astype(y_ref.dtype)                      # bf16 intermediate
    # BN partial stats from the f32 accumulator (not the rounded bf16 values).
    sum_ref[0, 0] = jnp.sum(acc, axis=1, keepdims=True)
    ssq_ref[0, 0] = jnp.sum(acc * acc, axis=1, keepdims=True)


def bn_relu_kernel(y_ref, sb_ref, o_ref):
    # y_ref: (1, 1, O8, M) bf16 ; sb_ref: (O8, 2) f32 = [scale | bias] ; o_ref: (1, 1, O8, M)
    y = y_ref[0, 0].astype(jnp.float32)                        # (O8, M)
    scale = sb_ref[:, 0:1]                                     # (O8, 1) broadcast over lanes
    bias = sb_ref[:, 1:2]
    o_ref[0, 0] = jnp.maximum(y * scale + bias, 0.0).astype(o_ref.dtype)


def basic_conv2d(x_nchw, w_oihw, gamma, beta, *, stride=1, padding=1, dilation=1,
                 eps=1e-3, compute_dtype=jnp.bfloat16):
    assert stride == 1 and dilation == 1, "only stride=1 / dilation=1 conv supported"
    N, C, H, W = x_nchw.shape
    O, Cw, KH, KW = w_oihw.shape
    assert C == Cw
    Hp, Wp = H + 2 * padding, W + 2 * padding
    Ho, Wo = Hp - KH + 1, Wp - KW + 1
    TH = _pick_row_tile(Ho, Wo)
    n_rt = Ho // TH
    SH = TH + KH - 1
    M = TH * Wo
    KC = KH * KW * C
    O8 = _round_up(O, 8)

    # ---- layout prep (plain JAX; small next to the conv) ------------------------------
    # TODO(synk): fuse the NCHW->NHWC transpose / pad / halo duplication into pass 1 via
    # element-offset index maps or a manual DMA to save one HBM pass over x.
    xh = jnp.transpose(x_nchw, (0, 2, 3, 1))                   # NCHW -> NHWC
    xh = jnp.pad(xh, ((0, 0), (padding, padding), (padding, padding), (0, 0)))
    xh = xh.astype(compute_dtype)
    # Overlapping row slabs (KH-1 halo rows duplicated): (N, n_rt, SH, Wp, C).
    x_slabs = jnp.stack([xh[:, r * TH:r * TH + SH] for r in range(n_rt)], axis=1)

    # im2col-packed weights: (kh, kw, c) folded into one K axis; O padded only to 8.
    w2 = jnp.transpose(w_oihw, (2, 3, 1, 0)).reshape(KC, O)
    w2 = jnp.pad(w2, ((0, 0), (0, O8 - O))).T.astype(compute_dtype)   # (O8, KC)

    cparams = pltpu.CompilerParams(
        dimension_semantics=("parallel", "parallel"),
        vmem_limit_bytes=32 * 1024 * 1024)

    cost1 = pl.CostEstimate(
        flops=2 * N * n_rt * O8 * M * KC,
        transcendentals=0,
        bytes_accessed=(x_slabs.size * x_slabs.dtype.itemsize
                        + w2.size * w2.dtype.itemsize
                        + N * n_rt * O8 * (M * 2 + 2 * 4)))

    # ---- pass 1: conv (one im2col GEMM per tile) + BN partial stats --------------------
    y, sums, ssqs = pl.pallas_call(
        functools.partial(conv_stats_kernel, KH=KH, KW=KW),
        grid=(N, n_rt),
        in_specs=[
            pl.BlockSpec((1, 1, SH, Wp, C), lambda n, r: (n, r, 0, 0, 0)),
            pl.BlockSpec((O8, KC), lambda n, r: (0, 0)),
        ],
        out_specs=[
            pl.BlockSpec((1, 1, O8, M), lambda n, r: (n, r, 0, 0)),
            pl.BlockSpec((1, 1, O8, 1), lambda n, r: (n, r, 0, 0)),
            pl.BlockSpec((1, 1, O8, 1), lambda n, r: (n, r, 0, 0)),
        ],
        out_shape=[
            jax.ShapeDtypeStruct((N, n_rt, O8, M), compute_dtype),
            jax.ShapeDtypeStruct((N, n_rt, O8, 1), jnp.float32),
            jax.ShapeDtypeStruct((N, n_rt, O8, 1), jnp.float32),
        ],
        scratch_shapes=[pltpu.VMEM((TH, Wo, KC), compute_dtype)],
        compiler_params=cparams,
        cost_estimate=cost1,
    )(x_slabs, w2)

    # ---- finalize training-mode (biased) batch stats; fold BN into one FMA -------------
    cnt = N * Ho * Wo
    mean = jnp.sum(sums, axis=(0, 1))[:, 0] / cnt
    var = jnp.maximum(jnp.sum(ssqs, axis=(0, 1))[:, 0] / cnt - mean * mean, 0.0)
    # TODO(synk): E[y^2]-mean^2 cancels catastrophically when |mean| >> std; switch to a
    # shifted / two-pass variance for layers with large activation offsets.
    gamma_p = jnp.pad(gamma.astype(jnp.float32), (0, O8 - O))
    beta_p = jnp.pad(beta.astype(jnp.float32), (0, O8 - O))
    scale = gamma_p * lax.rsqrt(var + eps)
    bias = beta_p - mean * scale
    sb = jnp.stack([scale, bias], axis=1)                      # (O8, 2)

    # ---- pass 2: y*scale + bias, ReLU (mem-bound FMA over lane-dense tiles) ------------
    out_t = pl.pallas_call(
        bn_relu_kernel,
        grid=(N, n_rt),
        in_specs=[
            pl.BlockSpec((1, 1, O8, M), lambda n, r: (n, r, 0, 0)),
            pl.BlockSpec((O8, 2), lambda n, r: (0, 0)),
        ],
        out_specs=pl.BlockSpec((1, 1, O8, M), lambda n, r: (n, r, 0, 0)),
        out_shape=jax.ShapeDtypeStruct((N, n_rt, O8, M), x_nchw.dtype),
        compiler_params=cparams,
        cost_estimate=pl.CostEstimate(
            flops=2 * N * n_rt * O8 * M, transcendentals=0,
            bytes_accessed=N * n_rt * O8 * M * (2 + x_nchw.dtype.itemsize)),
    )(y, sb)

    # Untangle (N, n_rt, O8, TH*Wo) -> NCHW and drop channel padding (plain JAX, one pass).
    out = out_t.reshape(N, n_rt, O8, TH, Wo)
    out = jnp.transpose(out, (0, 2, 1, 3, 4)).reshape(N, O8, Ho, Wo)
    return out[:, :O]


def reference(x_nchw, w_oihw, gamma, beta, *, padding=1, eps=1e-3):
    y = lax.conv_general_dilated(
        x_nchw, w_oihw, window_strides=(1, 1),
        padding=[(padding, padding), (padding, padding)],
        dimension_numbers=("NCHW", "OIHW", "NCHW"),
    )
    mean = jnp.mean(y, axis=(0, 2, 3), keepdims=True)
    var = jnp.mean(jnp.square(y - mean), axis=(0, 2, 3), keepdims=True)
    y = (y - mean) * lax.rsqrt(var + eps)
    y = y * gamma.reshape(1, -1, 1, 1) + beta.reshape(1, -1, 1, 1)
    return jnp.maximum(y, 0.0)


if __name__ == "__main__":
    key = jax.random.PRNGKey(0)
    kx, kw = jax.random.split(key)

    N, C_in, C_out, H, W, K = 2, 4, 8, 16, 16, 3

    x = jax.random.normal(kx, (N, C_in, H, W), dtype=jnp.float32)
    fan_in = C_in * K * K
    bound = 1.0 / (fan_in ** 0.5)
    w = jax.random.uniform(kw, (C_out, C_in, K, K), jnp.float32, -bound, bound)
    gamma = jnp.ones((C_out,), jnp.float32)      # PyTorch BN defaults
    beta = jnp.zeros((C_out,), jnp.float32)

    out = basic_conv2d(x, w, gamma, beta, padding=1, eps=1e-3)
    out = jax.block_until_ready(out)

    ref = reference(x, w, gamma, beta, padding=1, eps=1e-3)
    assert out.shape == (N, C_out, H, W), out.shape
    # bf16 conv operands + bf16 intermediate vs f32 reference -> relaxed (still tight) tol.
    err = float(jnp.max(jnp.abs(out - ref)))
    assert jnp.allclose(out, ref, atol=1e-2, rtol=1e-2), err

    print("KERNEL_OK")
</pallas_src>

<mosaic_0001>
module attributes {stable_mosaic.version = 11 : i64} {
  func.func @conv_stats_kernel(%arg0: i32, %arg1: i32, %arg2: memref<1x1x10x18x4xbf16, #tpu.memory_space<vmem>>, %arg3: memref<8x36xbf16, #tpu.memory_space<vmem>>, %arg4: memref<1x1x8x128xbf16, #tpu.memory_space<vmem>>, %arg5: memref<1x1x8x1xf32, #tpu.memory_space<vmem>>, %arg6: memref<1x1x8x1xf32, #tpu.memory_space<vmem>>, %arg7: memref<8x16x36xbf16, #tpu.memory_space<vmem>>) attributes {dimension_semantics = [#tpu.dimension_semantics<parallel>, #tpu.dimension_semantics<parallel>], iteration_bounds = array<i64: 2, 2>, scalar_prefetch = 0 : i64, scratch_operands = 1 : i64, tpu.core_type = #tpu.core_type<tc>, window_params = [{transform_indices = @transform_0, window_bounds = array<i64: 1, 1, 10, 18, 4>}, {pipeline_mode = #tpu.pipeline_mode<synchronous>, transform_indices = @transform_1, window_bounds = array<i64: 8, 36>}, {transform_indices = @transform_2, window_bounds = array<i64: 1, 1, 8, 128>}, {transform_indices = @transform_3, window_bounds = array<i64: 1, 1, 8, 1>}, {transform_indices = @transform_4, window_bounds = array<i64: 1, 1, 8, 1>}]} {
    %c0 = arith.constant 0 : index
    %c0_0 = arith.constant 0 : index
    %c0_1 = arith.constant 0 : index
    %c0_2 = arith.constant 0 : index
    %c0_3 = arith.constant 0 : index
    %0 = vector.load %arg2[%c0, %c0_0, %c0_1, %c0_2, %c0_3] : memref<1x1x10x18x4xbf16, #tpu.memory_space<vmem>>, vector<1x1x10x18x4xbf16>
    %1 = vector.shape_cast %0 : vector<1x1x10x18x4xbf16> to vector<10x18x4xbf16>
    %2 = vector.extract_strided_slice %1 {offsets = [0, 0, 0], sizes = [8, 16, 4], strides = [1, 1, 1]} : vector<10x18x4xbf16> to vector<8x16x4xbf16>
    %c0_4 = arith.constant 0 : index
    %c0_5 = arith.constant 0 : index
    %c0_6 = arith.constant 0 : index
    %3 = vector.load %arg7[%c0_4, %c0_5, %c0_6] : memref<8x16x36xbf16, #tpu.memory_space<vmem>>, vector<8x16x4xbf16>
    tpu.vector_store %arg7[%c0_4, %c0_5, %c0_6], %2 {strides = array<i32>} : memref<8x16x36xbf16, #tpu.memory_space<vmem>>, vector<8x16x4xbf16>,
    %4 = vector.extract_strided_slice %1 {offsets = [0, 1, 0], sizes = [8, 16, 4], strides = [1, 1, 1]} : vector<10x18x4xbf16> to vector<8x16x4xbf16>
    %c0_7 = arith.constant 0 : index
    %c0_8 = arith.constant 0 : index
    %c4 = arith.constant 4 : index
    %5 = vector.load %arg7[%c0_7, %c0_8, %c4] : memref<8x16x36xbf16, #tpu.memory_space<vmem>>, vector<8x16x4xbf16>
    tpu.vector_store %arg7[%c0_7, %c0_8, %c4], %4 {strides = array<i32>} : memref<8x16x36xbf16, #tpu.memory_space<vmem>>, vector<8x16x4xbf16>,
    %6 = vector.extract_strided_slice %1 {offsets = [0, 2, 0], sizes = [8, 16, 4], strides = [1, 1, 1]} : vector<10x18x4xbf16> to vector<8x16x4xbf16>
    %c0_9 = arith.constant 0 : index
    %c0_10 = arith.constant 0 : index
    %c8 = arith.constant 8 : index
    %7 = vector.load %arg7[%c0_9, %c0_10, %c8] : memref<8x16x36xbf16, #tpu.memory_space<vmem>>, vector<8x16x4xbf16>
    tpu.vector_store %arg7[%c0_9, %c0_10, %c8], %6 {strides = array<i32>} : memref<8x16x36xbf16, #tpu.memory_space<vmem>>, vector<8x16x4xbf16>,
    %8 = vector.extract_strided_slice %1 {offsets = [1, 0, 0], sizes = [8, 16, 4], strides = [1, 1, 1]} : vector<10x18x4xbf16> to vector<8x16x4xbf16>
    %c0_11 = arith.constant 0 : index
    %c0_12 = arith.constant 0 : index
    %c12 = arith.constant 12 : index
    %9 = vector.load %arg7[%c0_11, %c0_12, %c12] : memref<8x16x36xbf16, #tpu.memory_space<vmem>>, vector<8x16x4xbf16>
    tpu.vector_store %arg7[%c0_11, %c0_12, %c12], %8 {strides = array<i32>} : memref<8x16x36xbf16, #tpu.memory_space<vmem>>, vector<8x16x4xbf16>,
    %10 = vector.extract_strided_slice %1 {offsets = [1, 1, 0], sizes = [8, 16, 4], strides = [1, 1, 1]} : vector<10x18x4xbf16> to vector<8x16x4xbf16>
    %c0_13 = arith.constant 0 : index
    %c0_14 = arith.constant 0 : index
    %c16 = arith.constant 16 : index
    %11 = vector.load %arg7[%c0_13, %c0_14, %c16] : memref<8x16x36xbf16, #tpu.memory_space<vmem>>, vector<8x16x4xbf16>
    tpu.vector_store %arg7[%c0_13, %c0_14, %c16], %10 {strides = array<i32>} : memref<8x16x36xbf16, #tpu.memory_space<vmem>>, vector<8x16x4xbf16>,
    %12 = vector.extract_strided_slice %1 {offsets = [1, 2, 0], sizes = [8, 16, 4], strides = [1, 1, 1]} : vector<10x18x4xbf16> to vector<8x16x4xbf16>
    %c0_15 = arith.constant 0 : index
    %c0_16 = arith.constant 0 : index
    %c20 = arith.constant 20 : index
    %13 = vector.load %arg7[%c0_15, %c0_16, %c20] : memref<8x16x36xbf16, #tpu.memory_space<vmem>>, vector<8x16x4xbf16>
    tpu.vector_store %arg7[%c0_15, %c0_16, %c20], %12 {strides = array<i32>} : memref<8x16x36xbf16, #tpu.memory_space<vmem>>, vector<8x16x4xbf16>,
    %14 = vector.extract_strided_slice %1 {offsets = [2, 0, 0], sizes = [8, 16, 4], strides = [1, 1, 1]} : vector<10x18x4xbf16> to vector<8x16x4xbf16>
    %c0_17 = arith.constant 0 : index
    %c0_18 = arith.constant 0 : index
    %c24 = arith.constant 24 : index
    %15 = vector.load %arg7[%c0_17, %c0_18, %c24] : memref<8x16x36xbf16, #tpu.memory_space<vmem>>, vector<8x16x4xbf16>
    tpu.vector_store %arg7[%c0_17, %c0_18, %c24], %14 {strides = array<i32>} : memref<8x16x36xbf16, #tpu.memory_space<vmem>>, vector<8x16x4xbf16>,
    %16 = vector.extract_strided_slice %1 {offsets = [2, 1, 0], sizes = [8, 16, 4], strides = [1, 1, 1]} : vector<10x18x4xbf16> to vector<8x16x4xbf16>
    %c0_19 = arith.constant 0 : index
    %c0_20 = arith.constant 0 : index
    %c28 = arith.constant 28 : index
    %17 = vector.load %arg7[%c0_19, %c0_20, %c28] : memref<8x16x36xbf16, #tpu.memory_space<vmem>>, vector<8x16x4xbf16>
    tpu.vector_store %arg7[%c0_19, %c0_20, %c28], %16 {strides = array<i32>} : memref<8x16x36xbf16, #tpu.memory_space<vmem>>, vector<8x16x4xbf16>,
    %18 = vector.extract_strided_slice %1 {offsets = [2, 2, 0], sizes = [8, 16, 4], strides = [1, 1, 1]} : vector<10x18x4xbf16> to vector<8x16x4xbf16>
    %c0_21 = arith.constant 0 : index
    %c0_22 = arith.constant 0 : index
    %c32 = arith.constant 32 : index
    %19 = vector.load %arg7[%c0_21, %c0_22, %c32] : memref<8x16x36xbf16, #tpu.memory_space<vmem>>, vector<8x16x4xbf16>
    tpu.vector_store %arg7[%c0_21, %c0_22, %c32], %18 {strides = array<i32>} : memref<8x16x36xbf16, #tpu.memory_space<vmem>>, vector<8x16x4xbf16>,
    %c0_23 = arith.constant 0 : index
    %c0_24 = arith.constant 0 : index
    %c0_25 = arith.constant 0 : index
    %20 = vector.load %arg7[%c0_23, %c0_24, %c0_25] : memref<8x16x36xbf16, #tpu.memory_space<vmem>>, vector<8x16x36xbf16>
    %21 = vector.shape_cast %20 : vector<8x16x36xbf16> to vector<128x36xbf16>
    %c0_26 = arith.constant 0 : index
    %c0_27 = arith.constant 0 : index
    %22 = vector.load %arg3[%c0_26, %c0_27] : memref<8x36xbf16, #tpu.memory_space<vmem>>, vector<8x36xbf16>
    %cst = arith.constant dense<0.000000e+00> : vector<8x128xf32>
    %23 = tpu.matmul %22, %21, %cst {dimension_numbers = #tpu.dot_dimension_numbers<[1], [1], [0], [0], [0, 0, 1, 0], [], []>} : vector<8x36xbf16>, vector<128x36xbf16>, vector<8x128xf32> -> vector<8x128xf32>
    %24 = arith.truncf %23 : vector<8x128xf32> to vector<8x128xbf16>
    %c0_28 = arith.constant 0 : index
    %c0_29 = arith.constant 0 : index
    %c0_30 = arith.constant 0 : index
    %c0_31 = arith.constant 0 : index
    %25 = vector.load %arg4[%c0_28, %c0_29, %c0_30, %c0_31] : memref<1x1x8x128xbf16, #tpu.memory_space<vmem>>, vector<1x1x8x128xbf16>
    %26 = vector.shape_cast %25 : vector<1x1x8x128xbf16> to vector<8x128xbf16>
    %27 = vector.shape_cast %24 : vector<8x128xbf16> to vector<1x1x8x128xbf16>
    tpu.vector_store %arg4[%c0_28, %c0_29, %c0_30, %c0_31], %27 {strides = array<i32>} : memref<1x1x8x128xbf16, #tpu.memory_space<vmem>>, vector<1x1x8x128xbf16>,
    %cst_32 = arith.constant dense<0.000000e+00> : vector<8xf32>
    %28 = vector.multi_reduction <add>, %23, %cst_32 [1] : vector<8x128xf32> to vector<8xf32>
    %29 = vector.shape_cast %28 : vector<8xf32> to vector<8x1xf32>
    %c0_33 = arith.constant 0 : index
    %c0_34 = arith.constant 0 : index
    %c0_35 = arith.constant 0 : index
    %c0_36 = arith.constant 0 : index
    %30 = vector.load %arg5[%c0_33, %c0_34, %c0_35, %c0_36] : memref<1x1x8x1xf32, #tpu.memory_space<vmem>>, vector<1x1x8x1xf32>
    %31 = vector.shape_cast %30 : vector<1x1x8x1xf32> to vector<8x1xf32>
    %32 = vector.shape_cast %29 : vector<8x1xf32> to vector<1x1x8x1xf32>
    tpu.vector_store %arg5[%c0_33, %c0_34, %c0_35, %c0_36], %32 {strides = array<i32>} : memref<1x1x8x1xf32, #tpu.memory_space<vmem>>, vector<1x1x8x1xf32>,
    %33 = arith.mulf %23, %23 : vector<8x128xf32>
    %cst_37 = arith.constant dense<0.000000e+00> : vector<8xf32>
    %34 = vector.multi_reduction <add>, %33, %cst_37 [1] : vector<8x128xf32> to vector<8xf32>
    %35 = vector.shape_cast %34 : vector<8xf32> to vector<8x1xf32>
    %c0_38 = arith.constant 0 : index
    %c0_39 = arith.constant 0 : index
    %c0_40 = arith.constant 0 : index
    %c0_41 = arith.constant 0 : index
    %36 = vector.load %arg6[%c0_38, %c0_39, %c0_40, %c0_41] : memref<1x1x8x1xf32, #tpu.memory_space<vmem>>, vector<1x1x8x1xf32>
    %37 = vector.shape_cast %36 : vector<1x1x8x1xf32> to vector<8x1xf32>
    %38 = vector.shape_cast %35 : vector<8x1xf32> to vector<1x1x8x1xf32>
    tpu.vector_store %arg6[%c0_38, %c0_39, %c0_40, %c0_41], %38 {strides = array<i32>} : memref<1x1x8x1xf32, #tpu.memory_space<vmem>>, vector<1x1x8x1xf32>,
    return
  }
  func.func @transform_0(%arg0: i32, %arg1: i32) -> (i32, i32, i32, i32, i32) {
    %c0_i32 = arith.constant 0 : i32
    %c0_i32_0 = arith.constant 0 : i32
    %c0_i32_1 = arith.constant 0 : i32
    %c0_i32_2 = arith.constant 0 : i32
    return %arg0, %arg1, %c0_i32, %c0_i32_0, %c0_i32_1 : i32, i32, i32, i32, i32
  }
  func.func @transform_1(%arg0: i32, %arg1: i32) -> (i32, i32) {
    %c0_i32 = arith.constant 0 : i32
    %c0_i32_0 = arith.constant 0 : i32
    %c0_i32_1 = arith.constant 0 : i32
    return %c0_i32, %c0_i32_0 : i32, i32
  }
  func.func @transform_2(%arg0: i32, %arg1: i32) -> (i32, i32, i32, i32) {
    %c0_i32 = arith.constant 0 : i32
    %c0_i32_0 = arith.constant 0 : i32
    %c0_i32_1 = arith.constant 0 : i32
    return %arg0, %arg1, %c0_i32, %c0_i32_0 : i32, i32, i32, i32
  }
  func.func @transform_3(%arg0: i32, %arg1: i32) -> (i32, i32, i32, i32) {
    %c0_i32 = arith.constant 0 : i32
    %c0_i32_0 = arith.constant 0 : i32
    %c0_i32_1 = arith.constant 0 : i32
    return %arg0, %arg1, %c0_i32, %c0_i32_0 : i32, i32, i32, i32
  }
  func.func @transform_4(%arg0: i32, %arg1: i32) -> (i32, i32, i32, i32) {
    %c0_i32 = arith.constant 0 : i32
    %c0_i32_0 = arith.constant 0 : i32
    %c0_i32_1 = arith.constant 0 : i32
    return %arg0, %arg1, %c0_i32, %c0_i32_0 : i32, i32, i32, i32
  }
}

</mosaic_0001>

<llo_original>
// kernel: tpu_custom_call.1
$region0: #{tpu_custom_call.1}
  #allocation0 [shape = 'u32[]', space=smem, size = 0x4, offset = 0x4, fixed_abs, tag = 'smem constant byte address 0x4 - core index']
  #allocation1 [shape = 'u32[144,128]{1,0:T(1,128)}', space=vmem, size = 0x12000, scoped, tag = 'internal scratch']
  #allocation2 [shape = 'bf16[8,16,36]{2,1,0:T(8,128)(2,1)}', space=vmem, size = 0x8000, scoped, tag = 'scratch operand']
  %s0 = inlined_call_operand.vmem [shape: bf16[2,2,10,18,4], index: 0, kind: input, shape index: {}]
  %s1 = inlined_call_operand.vmem [shape: bf16[8,36], index: 1, kind: input, shape index: {}]
  %s2 = inlined_call_operand.hbm [shape: bf16[2,2,8,128], index: 2, kind: output, shape index: {0}]
  %s3 = inlined_call_operand.vmem [shape: f32[2,2,8,1], index: 3, kind: output, shape index: {1}]
  %s4 = inlined_call_operand.vmem [shape: f32[2,2,8,1], index: 4, kind: output, shape index: {2}]
  %5 = xla_tuple %s2, %s3, %s4
  %s6 = sld [smem:[#allocation0]]
  $region57: #{tpu_custom_call.1} parent=0
    _
  %s8 = ssub.s32 1, %s6
  %s9 = scalar_select 0, %s8, %s6
  $region1: #{tpu_custom_call.1} parent=0
    #allocation3 [shape = 'u8[4096]{0}', space=vmem, size = 0x1000, scoped, tag = 'output window, operand 0']
    #allocation4 [shape = 's32[2]{0}', space=sflag, size = 0x8, scoped, tag = 'scoped memory for tpu_custom_call.1']
    %10 = vsyncpa [#allocation4], 0
    %s11 = scalar_lea.sflag [#allocation4], 1
    %12 = vsyncpa %s11, 0
    loop: start=0, step=1, limit=6
    $region2: #{tpu_custom_call.1} parent=1 // loop_pre_header
      _
    $region3: #{tpu_custom_call.1} parent=1 // loop_header
      %s14 = sphi 0, %s18
      %p15 = scmp.ge.s32.totalorder %s14, 6
      %s21 = sphi 0, %s33
      %s22 = sphi 0, %s29
      %s23 = sphi 0, %s21
      %s24 = sphi 0, %s22
      %s25 = sphi 0, %s23
      %s26 = sphi 0, %s24
      %s38 = sphi 0, %s40
      %s41 = sphi 0, %s38
      %s42 = sphi 0, %s41
      %s58 = sphi 0, %s42
      %s62 = sphi 0, %s62
      %s64 = sphi 0, %s62
      %s65 = sphi 0, %s64
      %s79 = sphi 0, %s65
      %s87 = sphi 0, %s89
      %s90 = sphi 0, %s87
      %s91 = sphi 0, %s90
      %s107 = sphi 0, %s91
      %s115 = sphi 0, %s117
      %s118 = sphi 0, %s115
      %s119 = sphi 0, %s118
      %s135 = sphi 0, %s119
      %s143 = sphi 0, %s145
      %s146 = sphi 0, %s143
      %s147 = sphi 0, %s146
      %s163 = sphi 0, %s147
    $region4: #{tpu_custom_call.1} parent=1 // loop_header_branch
      %17 = sbr.rel (%p15) target = $region8
    $region5: #{tpu_custom_call.1} parent=1 // loop_body
      %s19 = ssub.s32 %s14, 1
      %s20 = ssub.s32 %s14, 2
      %s27 = sadd.s32 1, %s22
      %p28 = scmp.ge.s32.totalorder %s27, 2
      %s29 = scalar_select %p28, 0, %s27
      %s30 = sadd.s32 1, %s21
      %s31 = scalar_select %p28, %s30, %s21
      %p32 = scmp.ge.s32.totalorder %s31, 2
      %s33 = scalar_select %p32, 0, %s31
      %s34 = ssub.s32 %s21, %s33
      %s35 = ssub.s32 %s22, %s29
      %s36 = sor.u32 %s34, %s35
      %p37 = scmp.eq.s32.totalorder %s36, 0
      %s39 = sadd.s32 %s38, 1
      %s40 = scalar_select %p37, %s38, %s39
      %p43 = pneg %p37
      %p44 = scmp.eq.s32.totalorder %s14, 3
      %p45 = por %p43, %p44
      %p46 = scmp.ne.s32.totalorder %s38, %s41
      %p47 = scmp.eq.s32.totalorder %s14, 0
      %p48 = por %p46, %p47
      %p49 = scmp.ne.s32.totalorder %s38, %s41
      %p50 = scmp.eq.s32.totalorder %s19, 3
      %p51 = por %p49, %p50
      %p52 = scmp.ne.s32.totalorder %s41, %s42
      %p53 = scmp.eq.s32.totalorder %s19, 0
      %p54 = por %p52, %p53
      %p55 = scmp.ne.s32.totalorder %s41, %s42
      %p56 = scmp.eq.s32.totalorder %s20, 3
      %p57 = por %p55, %p56
      %p59 = scmp.ne.s32.totalorder %s42, %s58
      %p60 = scmp.eq.s32.totalorder %s20, 0
      %p61 = por %p59, %p60
      %s63 = sadd.s32 %s62, 1
      %p66 = scmp.eq.s32.totalorder %s14, 3
      %p67 = scmp.ne.s32.totalorder %s62, %s64
      %p68 = scmp.eq.s32.totalorder %s14, 0
      %p69 = por %p67, %p68
      %p70 = scmp.ne.s32.totalorder %s62, %s64
      %p71 = scmp.eq.s32.totalorder %s19, 3
      %p72 = por %p70, %p71
      %p73 = scmp.ne.s32.totalorder %s64, %s65
      %p74 = scmp.eq.s32.totalorder %s19, 0
      %p75 = por %p73, %p74
      %p76 = scmp.ne.s32.totalorder %s64, %s65
      %p77 = scmp.eq.s32.totalorder %s20, 3
      %p78 = por %p76, %p77
      %p80 = scmp.ne.s32.totalorder %s65, %s79
      %p81 = scmp.eq.s32.totalorder %s20, 0
      %p82 = por %p80, %p81
      %s83 = ssub.s32 %s21, %s33
      %s84 = ssub.s32 %s22, %s29
      %s85 = sor.u32 %s83, %s84
      %p86 = scmp.eq.s32.totalorder %s85, 0
      %s88 = sadd.s32 %s87, 1
      %s89 = scalar_select %p86, %s87, %s88
      %p92 = pneg %p86
      %p93 = scmp.eq.s32.totalorder %s14, 3
      %p94 = por %p92, %p93
      %p95 = scmp.ne.s32.totalorder %s87, %s90
      %p96 = scmp.eq.s32.totalorder %s14, 0
      %p97 = por %p95, %p96
      %p98 = scmp.ne.s32.totalorder %s87, %s90
      %p99 = scmp.eq.s32.totalorder %s19, 3
      %p100 = por %p98, %p99
      %p101 = scmp.ne.s32.totalorder %s90, %s91
      %p102 = scmp.eq.s32.totalorder %s19, 0
      %p103 = por %p101, %p102
      %p104 = scmp.ne.s32.totalorder %s90, %s91
      %p105 = scmp.eq.s32.totalorder %s20, 3
      %p106 = por %p104, %p105
      %p108 = scmp.ne.s32.totalorder %s91, %s107
      %p109 = scmp.eq.s32.totalorder %s20, 0
      %p110 = por %p108, %p109
      %s111 = ssub.s32 %s21, %s33
      %s112 = ssub.s32 %s22, %s29
      %s113 = sor.u32 %s111, %s112
      %p114 = scmp.eq.s32.totalorder %s113, 0
      %s116 = sadd.s32 %s115, 1
      %s117 = scalar_select %p114, %s115, %s116
      %p120 = pneg %p114
      %p121 = scmp.eq.s32.totalorder %s14, 3
      %p122 = por %p120, %p121
      %p123 = scmp.ne.s32.totalorder %s115, %s118
      %p124 = scmp.eq.s32.totalorder %s14, 0
      %p125 = por %p123, %p124
      %p126 = scmp.ne.s32.totalorder %s115, %s118
      %p127 = scmp.eq.s32.totalorder %s19, 3
      %p128 = por %p126, %p127
      %p129 = scmp.ne.s32.totalorder %s118, %s119
      %p130 = scmp.eq.s32.totalorder %s19, 0
      %p131 = por %p129, %p130
      %p132 = scmp.ne.s32.totalorder %s118, %s119
      %p133 = scmp.eq.s32.totalorder %s20, 3
      %p134 = por %p132, %p133
      %p136 = scmp.ne.s32.totalorder %s119, %s135
      %p137 = scmp.eq.s32.totalorder %s20, 0
      %p138 = por %p136, %p137
      %s139 = ssub.s32 %s21, %s33
      %s140 = ssub.s32 %s22, %s29
      %s141 = sor.u32 %s139, %s140
      %p142 = scmp.eq.s32.totalorder %s141, 0
      %s144 = sadd.s32 %s143, 1
      %s145 = scalar_select %p142, %s143, %s144
      %p148 = pneg %p142
      %p149 = scmp.eq.s32.totalorder %s14, 3
      %p150 = por %p148, %p149
      %p151 = scmp.ne.s32.totalorder %s143, %s146
      %p152 = scmp.eq.s32.totalorder %s14, 0
      %p153 = por %p151, %p152
      %p154 = scmp.ne.s32.totalorder %s143, %s146
      %p155 = scmp.eq.s32.totalorder %s19, 3
      %p156 = por %p154, %p155
      %p157 = scmp.ne.s32.totalorder %s146, %s147
      %p158 = scmp.eq.s32.totalorder %s19, 0
      %p159 = por %p157, %p158
      %p160 = scmp.ne.s32.totalorder %s146, %s147
      %p161 = scmp.eq.s32.totalorder %s20, 3
      %p162 = por %p160, %p161
      %p164 = scmp.ne.s32.totalorder %s147, %s163
      %p165 = scmp.eq.s32.totalorder %s20, 0
      %p166 = por %p164, %p165
      %p167 = scmp.le.s32.totalorder 1, %s14
      %p168 = scmp.lt.s32.totalorder %s14, 5
      %p169 = pnand %p167, %p168
      %p170 = pneg %p169
      // Predicated region
      $region9: #{tpu_custom_call.1} parent=5 // pred_check
        _
      $region10: #{tpu_custom_call.1} parent=5 // pred_check_branch
        %172 = sbr.rel (%p169) target = $region12
      $region11: #{tpu_custom_call.1} parent=5 // pred_region
        %s173 = ssub.s32 %s14, 1
        // Predicated region
        $region13: #{tpu_custom_call.1} parent=11 // pred_check
          %p174 = pneg %p75
        $region14: #{tpu_custom_call.1} parent=11 // pred_check_branch
          %176 = sbr.rel (%p174) target = $region16
        $region15: #{tpu_custom_call.1} parent=11 // pred_region
          _
        $region16: #{tpu_custom_call.1} parent=11 // pred_fallthru
          _
      $region12: #{tpu_custom_call.1} parent=5 // pred_fallthru
        _
      %p177 = scmp.lt.s32.totalorder %s14, 4
      // Predicated region
      $region17: #{tpu_custom_call.1} parent=5 // pred_check
        %p178 = pneg %p177
      $region18: #{tpu_custom_call.1} parent=5 // pred_check_branch
        %180 = sbr.rel (%p178) target = $region20
      $region19: #{tpu_custom_call.1} parent=5 // pred_region
        // Predicated region
        $region21: #{tpu_custom_call.1} parent=19 // pred_check
          %p181 = pneg %p48
        $region22: #{tpu_custom_call.1} parent=19 // pred_check_branch
          %183 = sbr.rel (%p181) target = $region24
        $region23: #{tpu_custom_call.1} parent=19 // pred_region
          %p184 = scmp.lt.s32.totalorder %s21, 1
          %s185 = scalar_select %p184, %s21, 1
          %p186 = scmp.lt.s32.totalorder %s22, 1
          %s187 = scalar_select %p186, %s22, 1
          %s188 = smul.addr %s187, 30
          %s189 = smul.addr %s185, 60
          %s190 = sadd.s32 %s188, %s189
          %s191 = smul.addr %s190, 4
          %s192 = scalar_lea.vmem %s0, %s191
        $region24: #{tpu_custom_call.1} parent=19 // pred_fallthru
          _
      $region20: #{tpu_custom_call.1} parent=5 // pred_fallthru
        _
      %p193 = scmp.le.s32.totalorder 1, %s14
      %p194 = scmp.lt.s32.totalorder %s14, 5
      %p195 = pnand %p193, %p194
      %p196 = pneg %p195
      // Predicated region
      $region25: #{tpu_custom_call.1} parent=5 // pred_check
        _
      $region26: #{tpu_custom_call.1} parent=5 // pred_check_branch
        %198 = sbr.rel (%p195) target = $region28
      $region27: #{tpu_custom_call.1} parent=5 // pred_region
        %s199 = ssub.s32 %s14, 1
        %p200 = scmp.lt.s32.totalorder %s23, 1
        %s201 = scalar_select %p200, %s23, 1
        %p202 = scmp.lt.s32.totalorder %s24, 1
        %s203 = scalar_select %p202, %s24, 1
        %s204 = smul.addr %s203, 30
        %s205 = smul.addr %s201, 60
        %s206 = sadd.s32 %s204, %s205
        %s207 = smul.addr %s206, 4
        %s208 = scalar_lea.vmem %s0, %s207
        %p209 = pneg %p54
        %p210 = pneg %p51
        %p211 = pneg %p75
        %p212 = pneg %p72
        %p213 = pneg %p103
        %p214 = pneg %p100
        %s215 = sand.u32 %s90, 1
        %s216 = scalar_lea.sflag [#allocation4], %s215
        %s217 = sand.u32 %s90, 1
        %s218 = smul.addr %s217, 4
        %s219 = scalar_lea.vmem [#allocation3], %s218
        %p220 = pneg %p131
        %p221 = pneg %p128
        %p222 = scmp.lt.s32.totalorder %s23, 1
        %s223 = scalar_select %p222, %s23, 1
        %p224 = scmp.lt.s32.totalorder %s24, 1
        %s225 = scalar_select %p224, %s24, 1
        %s226 = smul.addr %s223, 2
        %s227 = sadd.s32 %s225, %s226
        %s228 = smul.addr %s227, 8
        %s229 = scalar_lea.vmem %s3, %s228
        %p230 = pneg %p159
        %p231 = pneg %p156
        %p232 = scmp.lt.s32.totalorder %s23, 1
        %s233 = scalar_select %p232, %s23, 1
        %p234 = scmp.lt.s32.totalorder %s24, 1
        %s235 = scalar_select %p234, %s24, 1
        %s236 = smul.addr %s233, 2
        %s237 = sadd.s32 %s235, %s236
        %s238 = smul.addr %s237, 8
        %s239 = scalar_lea.vmem %s4, %s238
        %p240 = scmp.lt.s32.totalorder %s23, 1
        %s241 = scalar_select %p240, %s23, 1
        %p242 = scmp.lt.s32.totalorder %s24, 1
        %s243 = scalar_select %p242, %s24, 1
        %s244 = smul.addr %s243, 30
        %s245 = smul.addr %s241, 60
        %s246 = sadd.s32 %s244, %s245
        %s247 = smul.addr %s246, 4
        %s248 = scalar_lea.vmem %s0, %s247
        %p249 = scmp.lt.s32.totalorder %s23, 1
        %s250 = scalar_select %p249, %s23, 1
        %p251 = scmp.lt.s32.totalorder %s24, 1
        %s252 = scalar_select %p251, %s24, 1
        %s253 = smul.addr %s250, 2
        %s254 = sadd.s32 %s252, %s253
        %s255 = smul.addr %s254, 8
        %s256 = scalar_lea.vmem %s3, %s255
        %p257 = scmp.lt.s32.totalorder %s23, 1
        %s258 = scalar_select %p257, %s23, 1
        %p259 = scmp.lt.s32.totalorder %s24, 1
        %s260 = scalar_select %p259, %s24, 1
        %s261 = smul.addr %s258, 2
        %s262 = sadd.s32 %s260, %s261
        %s263 = smul.addr %s262, 8
        %s264 = scalar_lea.vmem %s4, %s263
        %v266 = vld [vmem:[%s248] sm:$0xf]
        %v267 = vld [vmem:[%s248 + $0x4] sm:$0xf]
        %v268 = vld [vmem:[%s248 + $0x8] sm:$0x1]
        %v269 = vld [vmem:[%s248 + $0xc] sm:$0xf]
        %v270 = vld [vmem:[%s248 + $0x10] sm:$0xf]
        %v271 = vld [vmem:[%s248 + $0x14] sm:$0x1]
        %v272 = vld [vmem:[%s248 + $0x18] sm:$0xf]
        %v273 = vld [vmem:[%s248 + $0x1c] sm:$0xf]
        %v274 = vld [vmem:[%s248 + $0x20] sm:$0x1]
        %v275 = vld [vmem:[%s248 + $0x24] sm:$0xf]
        %v276 = vld [vmem:[%s248 + $0x28] sm:$0xf]
        %v277 = vld [vmem:[%s248 + $0x2c] sm:$0x1]
        %v278 = vld [vmem:[%s248 + $0x30] sm:$0xf]
        %v279 = vld [vmem:[%s248 + $0x34] sm:$0xf]
        %v280 = vld [vmem:[%s248 + $0x38] sm:$0x1]
        %v281 = vld [vmem:[%s248 + $0x3c] sm:$0xf]
        %v282 = vld [vmem:[%s248 + $0x40] sm:$0xf]
        %v283 = vld [vmem:[%s248 + $0x44] sm:$0x1]
        %v284 = vld [vmem:[%s248 + $0x48] sm:$0xf]
        %v285 = vld [vmem:[%s248 + $0x4c] sm:$0xf]
        %v286 = vld [vmem:[%s248 + $0x50] sm:$0x1]
        %v287 = vld [vmem:[%s248 + $0x54] sm:$0xf]
        %v288 = vld [vmem:[%s248 + $0x58] sm:$0xf]
        %v289 = vld [vmem:[%s248 + $0x5c] sm:$0x1]
        %v290 = vld [vmem:[%s248 + $0x60] sm:$0xf]
        %v291 = vld [vmem:[%s248 + $0x64] sm:$0xf]
        %v292 = vld [vmem:[%s248 + $0x68] sm:$0x1]
        %v293 = vld [vmem:[%s248 + $0x6c] sm:$0xf]
        %v294 = vld [vmem:[%s248 + $0x70] sm:$0xf]
        %v295 = vld [vmem:[%s248 + $0x74] sm:$0x1]
        %vm296 = vcmask 27648
        %297 = vst.msk [vmem:[#allocation2] sm:$0xf] %vm296, %v266
        %298 = vst.msk [vmem:[#allocation2 + $0x4] sm:$0xf] %vm296, %v267
        %299 = vst.msk [vmem:[#allocation2 + $0x8] sm:$0xf] %vm296, %v269
        %300 = vst.msk [vmem:[#allocation2 + $0xc] sm:$0xf] %vm296, %v270
        %301 = vst.msk [vmem:[#allocation2 + $0x10] sm:$0xf] %vm296, %v272
        %302 = vst.msk [vmem:[#allocation2 + $0x14] sm:$0xf] %vm296, %v273
        %303 = vst.msk [vmem:[#allocation2 + $0x18] sm:$0xf] %vm296, %v275
        %304 = vst.msk [vmem:[#allocation2 + $0x1c] sm:$0xf] %vm296, %v276
        %305 = vst.msk [vmem:[#allocation2 + $0x20] sm:$0xf] %vm296, %v278
        %306 = vst.msk [vmem:[#allocation2 + $0x24] sm:$0xf] %vm296, %v279
        %307 = vst.msk [vmem:[#allocation2 + $0x28] sm:$0xf] %vm296, %v281
        %308 = vst.msk [vmem:[#allocation2 + $0x2c] sm:$0xf] %vm296, %v282
        %309 = vst.msk [vmem:[#allocation2 + $0x30] sm:$0xf] %vm296, %v284
        %310 = vst.msk [vmem:[#allocation2 + $0x34] sm:$0xf] %vm296, %v285
        %311 = vst.msk [vmem:[#allocation2 + $0x38] sm:$0xf] %vm296, %v287
        %312 = vst.msk [vmem:[#allocation2 + $0x3c] sm:$0xf] %vm296, %v288
        %vm313 = vsmask.f32 3328
        %vm314 = vsmask.f32 7440
        %vm315 = vmor %vm313, %vm314
        %v317 = vshrl.u32 %v266, 16
        %v319 = vrot.slane %v317, 4
        %v320 = vshll.u32 %v266, 16
        %v322 = vrot.slane %v320, 5
        %v323 = vor.u32 %v319, %v322
        %v324 = vrot.slane %v323, 4
        %v326 = vshll.u32 %v267, 16
        %v328 = vrot.slane %v326, 5
        %v329 = vsel %vm315, %v324, %v328
        %v330 = vshrl.u32 %v267, 16
        %v332 = vrot.slane %v330, 4
        %v333 = vor.u32 %v332, %v328
        %v334 = vrot.slane %v333, 4
        %v336 = vshll.u32 %v268, 16
        %v338 = vrot.slane %v336, 5
        %v339 = vsel %vm315, %v334, %v338
        %v341 = vshrl.u32 %v269, 16
        %v343 = vrot.slane %v341, 4
        %v344 = vshll.u32 %v269, 16
        %v346 = vrot.slane %v344, 5
        %v347 = vor.u32 %v343, %v346
        %v348 = vrot.slane %v347, 4
        %v350 = vshll.u32 %v270, 16
        %v352 = vrot.slane %v350, 5
        %v353 = vsel %vm315, %v348, %v352
        %v354 = vshrl.u32 %v270, 16
        %v356 = vrot.slane %v354, 4
        %v357 = vor.u32 %v356, %v352
        %v358 = vrot.slane %v357, 4
        %v360 = vshll.u32 %v271, 16
        %v362 = vrot.slane %v360, 5
        %v363 = vsel %vm315, %v358, %v362
        %v365 = vshrl.u32 %v272, 16
        %v367 = vrot.slane %v365, 4
        %v368 = vshll.u32 %v272, 16
        %v370 = vrot.slane %v368, 5
        %v371 = vor.u32 %v367, %v370
        %v372 = vrot.slane %v371, 4
        %v374 = vshll.u32 %v273, 16
        %v376 = vrot.slane %v374, 5
        %v377 = vsel %vm315, %v372, %v376
        %v378 = vshrl.u32 %v273, 16
        %v380 = vrot.slane %v378, 4
        %v381 = vor.u32 %v380, %v376
        %v382 = vrot.slane %v381, 4
        %v384 = vshll.u32 %v274, 16
        %v386 = vrot.slane %v384, 5
        %v387 = vsel %vm315, %v382, %v386
        %v389 = vshrl.u32 %v275, 16
        %v391 = vrot.slane %v389, 4
        %v392 = vshll.u32 %v275, 16
        %v394 = vrot.slane %v392, 5
        %v395 = vor.u32 %v391, %v394
        %v396 = vrot.slane %v395, 4
        %v398 = vshll.u32 %v276, 16
        %v400 = vrot.slane %v398, 5
        %v401 = vsel %vm315, %v396, %v400
        %v402 = vshrl.u32 %v276, 16
        %v404 = vrot.slane %v402, 4
        %v405 = vor.u32 %v404, %v400
        %v406 = vrot.slane %v405, 4
        %v408 = vshll.u32 %v277, 16
        %v410 = vrot.slane %v408, 5
        %v411 = vsel %vm315, %v406, %v410
        %v413 = vshrl.u32 %v278, 16
        %v415 = vrot.slane %v413, 4
        %v416 = vshll.u32 %v278, 16
        %v418 = vrot.slane %v416, 5
        %v419 = vor.u32 %v415, %v418
        %v420 = vrot.slane %v419, 4
        %v422 = vshll.u32 %v279, 16
        %v424 = vrot.slane %v422, 5
        %v425 = vsel %vm315, %v420, %v424
        %v426 = vshrl.u32 %v279, 16
        %v428 = vrot.slane %v426, 4
        %v429 = vor.u32 %v428, %v424
        %v430 = vrot.slane %v429, 4
        %v432 = vshll.u32 %v280, 16
        %v434 = vrot.slane %v432, 5
        %v435 = vsel %vm315, %v430, %v434
        %v437 = vshrl.u32 %v281, 16
        %v439 = vrot.slane %v437, 4
        %v440 = vshll.u32 %v281, 16
        %v442 = vrot.slane %v440, 5
        %v443 = vor.u32 %v439, %v442
        %v444 = vrot.slane %v443, 4
        %v446 = vshll.u32 %v282, 16
        %v448 = vrot.slane %v446, 5
        %v449 = vsel %vm315, %v444, %v448
        %v450 = vshrl.u32 %v282, 16
        %v452 = vrot.slane %v450, 4
        %v453 = vor.u32 %v452, %v448
        %v454 = vrot.slane %v453, 4
        %v456 = vshll.u32 %v283, 16
        %v458 = vrot.slane %v456, 5
        %v459 = vsel %vm315, %v454, %v458
        %v461 = vshrl.u32 %v284, 16
        %v463 = vrot.slane %v461, 4
        %v464 = vshll.u32 %v284, 16
        %v466 = vrot.slane %v464, 5
        %v467 = vor.u32 %v463, %v466
        %v468 = vrot.slane %v467, 4
        %v470 = vshll.u32 %v285, 16
        %v472 = vrot.slane %v470, 5
        %v473 = vsel %vm315, %v468, %v472
        %v474 = vshrl.u32 %v285, 16
        %v476 = vrot.slane %v474, 4
        %v477 = vor.u32 %v476, %v472
        %v478 = vrot.slane %v477, 4
        %v480 = vshll.u32 %v286, 16
        %v482 = vrot.slane %v480, 5
        %v483 = vsel %vm315, %v478, %v482
        %v485 = vshrl.u32 %v287, 16
        %v487 = vrot.slane %v485, 4
        %v488 = vshll.u32 %v287, 16
        %v490 = vrot.slane %v488, 5
        %v491 = vor.u32 %v487, %v490
        %v492 = vrot.slane %v491, 4
        %v494 = vshll.u32 %v288, 16
        %v496 = vrot.slane %v494, 5
        %v497 = vsel %vm315, %v492, %v496
        %v498 = vshrl.u32 %v288, 16
        %v500 = vrot.slane %v498, 4
        %v501 = vor.u32 %v500, %v496
        %v502 = vrot.slane %v501, 4
        %v504 = vshll.u32 %v289, 16
        %v506 = vrot.slane %v504, 5
        %v507 = vsel %vm315, %v502, %v506
        %508 = vrot.lane.b32.xlu0 %v329, 4
        %v509 = vpop.permute.xlu0 %508
        %510 = vrot.lane.b32.xlu0 %v339, 4
        %v511 = vpop.permute.xlu0 %510
        %512 = vrot.lane.b32.xlu0 %v353, 4
        %v513 = vpop.permute.xlu0 %512
        %514 = vrot.lane.b32.xlu0 %v363, 4
        %v515 = vpop.permute.xlu0 %514
        %516 = vrot.lane.b32.xlu0 %v377, 4
        %v517 = vpop.permute.xlu0 %516
        %518 = vrot.lane.b32.xlu0 %v387, 4
        %v519 = vpop.permute.xlu0 %518
        %520 = vrot.lane.b32.xlu0 %v401, 4
        %v521 = vpop.permute.xlu0 %520
        %522 = vrot.lane.b32.xlu0 %v411, 4
        %v523 = vpop.permute.xlu0 %522
        %524 = vrot.lane.b32.xlu0 %v425, 4
        %v525 = vpop.permute.xlu0 %524
        %526 = vrot.lane.b32.xlu0 %v435, 4
        %v527 = vpop.permute.xlu0 %526
        %528 = vrot.lane.b32.xlu0 %v449, 4
        %v529 = vpop.permute.xlu0 %528
        %530 = vrot.lane.b32.xlu0 %v459, 4
        %v531 = vpop.permute.xlu0 %530
        %532 = vrot.lane.b32.xlu0 %v473, 4
        %v533 = vpop.permute.xlu0 %532
        %534 = vrot.lane.b32.xlu0 %v483, 4
        %v535 = vpop.permute.xlu0 %534
        %536 = vrot.lane.b32.xlu0 %v497, 4
        %v537 = vpop.permute.xlu0 %536
        %538 = vrot.lane.b32.xlu0 %v507, 4
        %v539 = vpop.permute.xlu0 %538
        %vm556 = vcmask 60448
        %557 = vst.msk [vmem:[#allocation2] sm:$0xf] %vm556, %v509
        %558 = vst.msk [vmem:[#allocation2 + $0x4] sm:$0xf] %vm556, %v511
        %559 = vst.msk [vmem:[#allocation2 + $0x8] sm:$0xf] %vm556, %v513
        %560 = vst.msk [vmem:[#allocation2 + $0xc] sm:$0xf] %vm556, %v515
        %561 = vst.msk [vmem:[#allocation2 + $0x10] sm:$0xf] %vm556, %v517
        %562 = vst.msk [vmem:[#allocation2 + $0x14] sm:$0xf] %vm556, %v519
        %563 = vst.msk [vmem:[#allocation2 + $0x18] sm:$0xf] %vm556, %v521
        %564 = vst.msk [vmem:[#allocation2 + $0x1c] sm:$0xf] %vm556, %v523
        %565 = vst.msk [vmem:[#allocation2 + $0x20] sm:$0xf] %vm556, %v525
        %566 = vst.msk [vmem:[#allocation2 + $0x24] sm:$0xf] %vm556, %v527
        %567 = vst.msk [vmem:[#allocation2 + $0x28] sm:$0xf] %vm556, %v529
        %568 = vst.msk [vmem:[#allocation2 + $0x2c] sm:$0xf] %vm556, %v531
        %569 = vst.msk [vmem:[#allocation2 + $0x30] sm:$0xf] %vm556, %v533
        %570 = vst.msk [vmem:[#allocation2 + $0x34] sm:$0xf] %vm556, %v535
        %571 = vst.msk [vmem:[#allocation2 + $0x38] sm:$0xf] %vm556, %v537
        %572 = vst.msk [vmem:[#allocation2 + $0x3c] sm:$0xf] %vm556, %v539
        %vm597 = vcmask 1042432
        %vm598 = vcmask 1046532
        %vm599 = vmor %vm597, %vm598
        %v600 = vrot.slane %v266, 5
        %v601 = vrot.slane %v600, 4
        %v602 = vrot.slane %v267, 5
        %v603 = vsel %vm599, %v601, %v602
        %v604 = vrot.slane %v602, 4
        %v605 = vrot.slane %v268, 5
        %v606 = vsel %vm599, %v604, %v605
        %v607 = vrot.slane %v269, 5
        %v608 = vrot.slane %v607, 4
        %v609 = vrot.slane %v270, 5
        %v610 = vsel %vm599, %v608, %v609
        %v611 = vrot.slane %v609, 4
        %v612 = vrot.slane %v271, 5
        %v613 = vsel %vm599, %v611, %v612
        %v614 = vrot.slane %v272, 5
        %v615 = vrot.slane %v614, 4
        %v616 = vrot.slane %v273, 5
        %v617 = vsel %vm599, %v615, %v616
        %v618 = vrot.slane %v616, 4
        %v619 = vrot.slane %v274, 5
        %v620 = vsel %vm599, %v618, %v619
        %v621 = vrot.slane %v275, 5
        %v622 = vrot.slane %v621, 4
        %v623 = vrot.slane %v276, 5
        %v624 = vsel %vm599, %v622, %v623
        %v625 = vrot.slane %v623, 4
        %v626 = vrot.slane %v277, 5
        %v627 = vsel %vm599, %v625, %v626
        %v628 = vrot.slane %v278, 5
        %v629 = vrot.slane %v628, 4
        %v630 = vrot.slane %v279, 5
        %v631 = vsel %vm599, %v629, %v630
        %v632 = vrot.slane %v630, 4
        %v633 = vrot.slane %v280, 5
        %v634 = vsel %vm599, %v632, %v633
        %v635 = vrot.slane %v281, 5
        %v636 = vrot.slane %v635, 4
        %v637 = vrot.slane %v282, 5
        %v638 = vsel %vm599, %v636, %v637
        %v639 = vrot.slane %v637, 4
        %v640 = vrot.slane %v283, 5
        %v641 = vsel %vm599, %v639, %v640
        %v642 = vrot.slane %v284, 5
        %v643 = vrot.slane %v642, 4
        %v644 = vrot.slane %v285, 5
        %v645 = vsel %vm599, %v643, %v644
        %v646 = vrot.slane %v644, 4
        %v647 = vrot.slane %v286, 5
        %v648 = vsel %vm599, %v646, %v647
        %v649 = vrot.slane %v287, 5
        %v650 = vrot.slane %v649, 4
        %v651 = vrot.slane %v288, 5
        %v652 = vsel %vm599, %v650, %v651
        %v653 = vrot.slane %v651, 4
        %v654 = vrot.slane %v289, 5
        %v655 = vsel %vm599, %v653, %v654
        %656 = vrot.lane.b32.xlu0 %v603, 8
        %v657 = vpop.permute.xlu0 %656
        %658 = vrot.lane.b32.xlu0 %v606, 8
        %v659 = vpop.permute.xlu0 %658
        %660 = vrot.lane.b32.xlu0 %v610, 8
        %v661 = vpop.permute.xlu0 %660
        %662 = vrot.lane.b32.xlu0 %v613, 8
        %v663 = vpop.permute.xlu0 %662
        %664 = vrot.lane.b32.xlu0 %v617, 8
        %v665 = vpop.permute.xlu0 %664
        %666 = vrot.lane.b32.xlu0 %v620, 8
        %v667 = vpop.permute.xlu0 %666
        %668 = vrot.lane.b32.xlu0 %v624, 8
        %v669 = vpop.permute.xlu0 %668
        %670 = vrot.lane.b32.xlu0 %v627, 8
        %v671 = vpop.permute.xlu0 %670
        %672 = vrot.lane.b32.xlu0 %v631, 8
        %v673 = vpop.permute.xlu0 %672
        %674 = vrot.lane.b32.xlu0 %v634, 8
        %v675 = vpop.permute.xlu0 %674
        %676 = vrot.lane.b32.xlu0 %v638, 8
        %v677 = vpop.permute.xlu0 %676
        %678 = vrot.lane.b32.xlu0 %v641, 8
        %v679 = vpop.permute.xlu0 %678
        %680 = vrot.lane.b32.xlu0 %v645, 8
        %v681 = vpop.permute.xlu0 %680
        %682 = vrot.lane.b32.xlu0 %v648, 8
        %v683 = vpop.permute.xlu0 %682
        %684 = vrot.lane.b32.xlu0 %v652, 8
        %v685 = vpop.permute.xlu0 %684
        %686 = vrot.lane.b32.xlu0 %v655, 8
        %v687 = vpop.permute.xlu0 %686
        %vm704 = vcmask 93248
        %705 = vst.msk [vmem:[#allocation2] sm:$0xf] %vm704, %v657
        %706 = vst.msk [vmem:[#allocation2 + $0x4] sm:$0xf] %vm704, %v659
        %707 = vst.msk [vmem:[#allocation2 + $0x8] sm:$0xf] %vm704, %v661
        %708 = vst.msk [vmem:[#allocation2 + $0xc] sm:$0xf] %vm704, %v663
        %709 = vst.msk [vmem:[#allocation2 + $0x10] sm:$0xf] %vm704, %v665
        %710 = vst.msk [vmem:[#allocation2 + $0x14] sm:$0xf] %vm704, %v667
        %711 = vst.msk [vmem:[#allocation2 + $0x18] sm:$0xf] %vm704, %v669
        %712 = vst.msk [vmem:[#allocation2 + $0x1c] sm:$0xf] %vm704, %v671
        %713 = vst.msk [vmem:[#allocation2 + $0x20] sm:$0xf] %vm704, %v673
        %714 = vst.msk [vmem:[#allocation2 + $0x24] sm:$0xf] %vm704, %v675
        %715 = vst.msk [vmem:[#allocation2 + $0x28] sm:$0xf] %vm704, %v677
        %716 = vst.msk [vmem:[#allocation2 + $0x2c] sm:$0xf] %vm704, %v679
        %717 = vst.msk [vmem:[#allocation2 + $0x30] sm:$0xf] %vm704, %v681
        %718 = vst.msk [vmem:[#allocation2 + $0x34] sm:$0xf] %vm704, %v683
        %719 = vst.msk [vmem:[#allocation2 + $0x38] sm:$0xf] %vm704, %v685
        %720 = vst.msk [vmem:[#allocation2 + $0x3c] sm:$0xf] %vm704, %v687
        %723 = vrot.lane.b32.xlu0 %v269, 12
        %v724 = vpop.permute.xlu0 %723
        %725 = vrot.lane.b32.xlu0 %v270, 12
        %v726 = vpop.permute.xlu0 %725
        %727 = vrot.lane.b32.xlu0 %v272, 12
        %v728 = vpop.permute.xlu0 %727
        %729 = vrot.lane.b32.xlu0 %v273, 12
        %v730 = vpop.permute.xlu0 %729
        %731 = vrot.lane.b32.xlu0 %v275, 12
        %v732 = vpop.permute.xlu0 %731
        %733 = vrot.lane.b32.xlu0 %v276, 12
        %v734 = vpop.permute.xlu0 %733
        %735 = vrot.lane.b32.xlu0 %v278, 12
        %v736 = vpop.permute.xlu0 %735
        %737 = vrot.lane.b32.xlu0 %v279, 12
        %v738 = vpop.permute.xlu0 %737
        %739 = vrot.lane.b32.xlu0 %v281, 12
        %v740 = vpop.permute.xlu0 %739
        %741 = vrot.lane.b32.xlu0 %v282, 12
        %v742 = vpop.permute.xlu0 %741
        %743 = vrot.lane.b32.xlu0 %v284, 12
        %v744 = vpop.permute.xlu0 %743
        %745 = vrot.lane.b32.xlu0 %v285, 12
        %v746 = vpop.permute.xlu0 %745
        %747 = vrot.lane.b32.xlu0 %v287, 12
        %v748 = vpop.permute.xlu0 %747
        %749 = vrot.lane.b32.xlu0 %v288, 12
        %v750 = vpop.permute.xlu0 %749
        %751 = vrot.lane.b32.xlu0 %v290, 12
        %v752 = vpop.permute.xlu0 %751
        %753 = vrot.lane.b32.xlu0 %v291, 12
        %v754 = vpop.permute.xlu0 %753
        %vm771 = vcmask 126048
        %772 = vst.msk [vmem:[#allocation2] sm:$0xf] %vm771, %v724
        %773 = vst.msk [vmem:[#allocation2 + $0x4] sm:$0xf] %vm771, %v726
        %774 = vst.msk [vmem:[#allocation2 + $0x8] sm:$0xf] %vm771, %v728
        %775 = vst.msk [vmem:[#allocation2 + $0xc] sm:$0xf] %vm771, %v730
        %776 = vst.msk [vmem:[#allocation2 + $0x10] sm:$0xf] %vm771, %v732
        %777 = vst.msk [vmem:[#allocation2 + $0x14] sm:$0xf] %vm771, %v734
        %778 = vst.msk [vmem:[#allocation2 + $0x18] sm:$0xf] %vm771, %v736
        %779 = vst.msk [vmem:[#allocation2 + $0x1c] sm:$0xf] %vm771, %v738
        %780 = vst.msk [vmem:[#allocation2 + $0x20] sm:$0xf] %vm771, %v740
        %781 = vst.msk [vmem:[#allocation2 + $0x24] sm:$0xf] %vm771, %v742
        %782 = vst.msk [vmem:[#allocation2 + $0x28] sm:$0xf] %vm771, %v744
        %783 = vst.msk [vmem:[#allocation2 + $0x2c] sm:$0xf] %vm771, %v746
        %784 = vst.msk [vmem:[#allocation2 + $0x30] sm:$0xf] %vm771, %v748
        %785 = vst.msk [vmem:[#allocation2 + $0x34] sm:$0xf] %vm771, %v750
        %786 = vst.msk [vmem:[#allocation2 + $0x38] sm:$0xf] %vm771, %v752
        %787 = vst.msk [vmem:[#allocation2 + $0x3c] sm:$0xf] %vm771, %v754
        %v789 = vshrl.u32 %v290, 16
        %v791 = vrot.slane %v789, 4
        %v792 = vshll.u32 %v290, 16
        %v794 = vrot.slane %v792, 5
        %v795 = vor.u32 %v791, %v794
        %v796 = vrot.slane %v795, 4
        %v798 = vshll.u32 %v291, 16
        %v800 = vrot.slane %v798, 5
        %v801 = vsel %vm315, %v796, %v800
        %v802 = vshrl.u32 %v291, 16
        %v804 = vrot.slane %v802, 4
        %v805 = vor.u32 %v804, %v800
        %v806 = vrot.slane %v805, 4
        %v808 = vshll.u32 %v292, 16
        %v810 = vrot.slane %v808, 5
        %v811 = vsel %vm315, %v806, %v810
        %812 = vrot.lane.b32.xlu0 %v353, 16
        %v813 = vpop.permute.xlu0 %812
        %814 = vrot.lane.b32.xlu0 %v363, 16
        %v815 = vpop.permute.xlu0 %814
        %816 = vrot.lane.b32.xlu0 %v377, 16
        %v817 = vpop.permute.xlu0 %816
        %818 = vrot.lane.b32.xlu0 %v387, 16
        %v819 = vpop.permute.xlu0 %818
        %820 = vrot.lane.b32.xlu0 %v401, 16
        %v821 = vpop.permute.xlu0 %820
        %822 = vrot.lane.b32.xlu0 %v411, 16
        %v823 = vpop.permute.xlu0 %822
        %824 = vrot.lane.b32.xlu0 %v425, 16
        %v825 = vpop.permute.xlu0 %824
        %826 = vrot.lane.b32.xlu0 %v435, 16
        %v827 = vpop.permute.xlu0 %826
        %828 = vrot.lane.b32.xlu0 %v449, 16
        %v829 = vpop.permute.xlu0 %828
        %830 = vrot.lane.b32.xlu0 %v459, 16
        %v831 = vpop.permute.xlu0 %830
        %832 = vrot.lane.b32.xlu0 %v473, 16
        %v833 = vpop.permute.xlu0 %832
        %834 = vrot.lane.b32.xlu0 %v483, 16
        %v835 = vpop.permute.xlu0 %834
        %836 = vrot.lane.b32.xlu0 %v497, 16
        %v837 = vpop.permute.xlu0 %836
        %838 = vrot.lane.b32.xlu0 %v507, 16
        %v839 = vpop.permute.xlu0 %838
        %840 = vrot.lane.b32.xlu0 %v801, 16
        %v841 = vpop.permute.xlu0 %840
        %842 = vrot.lane.b32.xlu0 %v811, 16
        %v843 = vpop.permute.xlu0 %842
        %vm860 = vcmask 158848
        %861 = vst.msk [vmem:[#allocation2] sm:$0xf] %vm860, %v813
        %862 = vst.msk [vmem:[#allocation2 + $0x4] sm:$0xf] %vm860, %v815
        %863 = vst.msk [vmem:[#allocation2 + $0x8] sm:$0xf] %vm860, %v817
        %864 = vst.msk [vmem:[#allocation2 + $0xc] sm:$0xf] %vm860, %v819
        %865 = vst.msk [vmem:[#allocation2 + $0x10] sm:$0xf] %vm860, %v821
        %866 = vst.msk [vmem:[#allocation2 + $0x14] sm:$0xf] %vm860, %v823
        %867 = vst.msk [vmem:[#allocation2 + $0x18] sm:$0xf] %vm860, %v825
        %868 = vst.msk [vmem:[#allocation2 + $0x1c] sm:$0xf] %vm860, %v827
        %869 = vst.msk [vmem:[#allocation2 + $0x20] sm:$0xf] %vm860, %v829
        %870 = vst.msk [vmem:[#allocation2 + $0x24] sm:$0xf] %vm860, %v831
        %871 = vst.msk [vmem:[#allocation2 + $0x28] sm:$0xf] %vm860, %v833
        %872 = vst.msk [vmem:[#allocation2 + $0x2c] sm:$0xf] %vm860, %v835
        %873 = vst.msk [vmem:[#allocation2 + $0x30] sm:$0xf] %vm860, %v837
        %874 = vst.msk [vmem:[#allocation2 + $0x34] sm:$0xf] %vm860, %v839
        %875 = vst.msk [vmem:[#allocation2 + $0x38] sm:$0xf] %vm860, %v841
        %876 = vst.msk [vmem:[#allocation2 + $0x3c] sm:$0xf] %vm860, %v843
        %v878 = vrot.slane %v290, 5
        %v879 = vrot.slane %v878, 4
        %v880 = vrot.slane %v291, 5
        %v881 = vsel %vm599, %v879, %v880
        %v882 = vrot.slane %v880, 4
        %v883 = vrot.slane %v292, 5
        %v884 = vsel %vm599, %v882, %v883
        %885 = vrot.lane.b32.xlu0 %v610, 20
        %v886 = vpop.permute.xlu0 %885
        %887 = vrot.lane.b32.xlu0 %v613, 20
        %v888 = vpop.permute.xlu0 %887
        %889 = vrot.lane.b32.xlu0 %v617, 20
        %v890 = vpop.permute.xlu0 %889
        %891 = vrot.lane.b32.xlu0 %v620, 20
        %v892 = vpop.permute.xlu0 %891
        %893 = vrot.lane.b32.xlu0 %v624, 20
        %v894 = vpop.permute.xlu0 %893
        %895 = vrot.lane.b32.xlu0 %v627, 20
        %v896 = vpop.permute.xlu0 %895
        %897 = vrot.lane.b32.xlu0 %v631, 20
        %v898 = vpop.permute.xlu0 %897
        %899 = vrot.lane.b32.xlu0 %v634, 20
        %v900 = vpop.permute.xlu0 %899
        %901 = vrot.lane.b32.xlu0 %v638, 20
        %v902 = vpop.permute.xlu0 %901
        %903 = vrot.lane.b32.xlu0 %v641, 20
        %v904 = vpop.permute.xlu0 %903
        %905 = vrot.lane.b32.xlu0 %v645, 20
        %v906 = vpop.permute.xlu0 %905
        %907 = vrot.lane.b32.xlu0 %v648, 20
        %v908 = vpop.permute.xlu0 %907
        %909 = vrot.lane.b32.xlu0 %v652, 20
        %v910 = vpop.permute.xlu0 %909
        %911 = vrot.lane.b32.xlu0 %v655, 20
        %v912 = vpop.permute.xlu0 %911
        %913 = vrot.lane.b32.xlu0 %v881, 20
        %v914 = vpop.permute.xlu0 %913
        %915 = vrot.lane.b32.xlu0 %v884, 20
        %v916 = vpop.permute.xlu0 %915
        %vm933 = vcmask 191648
        %934 = vst.msk [vmem:[#allocation2] sm:$0xf] %vm933, %v886
        %935 = vst.msk [vmem:[#allocation2 + $0x4] sm:$0xf] %vm933, %v888
        %936 = vst.msk [vmem:[#allocation2 + $0x8] sm:$0xf] %vm933, %v890
        %937 = vst.msk [vmem:[#allocation2 + $0xc] sm:$0xf] %vm933, %v892
        %938 = vst.msk [vmem:[#allocation2 + $0x10] sm:$0xf] %vm933, %v894
        %939 = vst.msk [vmem:[#allocation2 + $0x14] sm:$0xf] %vm933, %v896
        %940 = vst.msk [vmem:[#allocation2 + $0x18] sm:$0xf] %vm933, %v898
        %941 = vst.msk [vmem:[#allocation2 + $0x1c] sm:$0xf] %vm933, %v900
        %942 = vst.msk [vmem:[#allocation2 + $0x20] sm:$0xf] %vm933, %v902
        %943 = vst.msk [vmem:[#allocation2 + $0x24] sm:$0xf] %vm933, %v904
        %944 = vst.msk [vmem:[#allocation2 + $0x28] sm:$0xf] %vm933, %v906
        %945 = vst.msk [vmem:[#allocation2 + $0x2c] sm:$0xf] %vm933, %v908
        %946 = vst.msk [vmem:[#allocation2 + $0x30] sm:$0xf] %vm933, %v910
        %947 = vst.msk [vmem:[#allocation2 + $0x34] sm:$0xf] %vm933, %v912
        %948 = vst.msk [vmem:[#allocation2 + $0x38] sm:$0xf] %vm933, %v914
        %949 = vst.msk [vmem:[#allocation2 + $0x3c] sm:$0xf] %vm933, %v916
        %952 = vrot.lane.b32.xlu0 %v272, 24
        %v953 = vpop.permute.xlu0 %952
        %954 = vrot.lane.b32.xlu0 %v273, 24
        %v955 = vpop.permute.xlu0 %954
        %956 = vrot.lane.b32.xlu0 %v275, 24
        %v957 = vpop.permute.xlu0 %956
        %958 = vrot.lane.b32.xlu0 %v276, 24
        %v959 = vpop.permute.xlu0 %958
        %960 = vrot.lane.b32.xlu0 %v278, 24
        %v961 = vpop.permute.xlu0 %960
        %962 = vrot.lane.b32.xlu0 %v279, 24
        %v963 = vpop.permute.xlu0 %962
        %964 = vrot.lane.b32.xlu0 %v281, 24
        %v965 = vpop.permute.xlu0 %964
        %966 = vrot.lane.b32.xlu0 %v282, 24
        %v967 = vpop.permute.xlu0 %966
        %968 = vrot.lane.b32.xlu0 %v284, 24
        %v969 = vpop.permute.xlu0 %968
        %970 = vrot.lane.b32.xlu0 %v285, 24
        %v971 = vpop.permute.xlu0 %970
        %972 = vrot.lane.b32.xlu0 %v287, 24
        %v973 = vpop.permute.xlu0 %972
        %974 = vrot.lane.b32.xlu0 %v288, 24
        %v975 = vpop.permute.xlu0 %974
        %976 = vrot.lane.b32.xlu0 %v290, 24
        %v977 = vpop.permute.xlu0 %976
        %978 = vrot.lane.b32.xlu0 %v291, 24
        %v979 = vpop.permute.xlu0 %978
        %980 = vrot.lane.b32.xlu0 %v293, 24
        %v981 = vpop.permute.xlu0 %980
        %982 = vrot.lane.b32.xlu0 %v294, 24
        %v983 = vpop.permute.xlu0 %982
        %vm1000 = vcmask 224448
        %1001 = vst.msk [vmem:[#allocation2] sm:$0xf] %vm1000, %v953
        %1002 = vst.msk [vmem:[#allocation2 + $0x4] sm:$0xf] %vm1000, %v955
        %1003 = vst.msk [vmem:[#allocation2 + $0x8] sm:$0xf] %vm1000, %v957
        %1004 = vst.msk [vmem:[#allocation2 + $0xc] sm:$0xf] %vm1000, %v959
        %1005 = vst.msk [vmem:[#allocation2 + $0x10] sm:$0xf] %vm1000, %v961
        %1006 = vst.msk [vmem:[#allocation2 + $0x14] sm:$0xf] %vm1000, %v963
        %1007 = vst.msk [vmem:[#allocation2 + $0x18] sm:$0xf] %vm1000, %v965
        %1008 = vst.msk [vmem:[#allocation2 + $0x1c] sm:$0xf] %vm1000, %v967
        %1009 = vst.msk [vmem:[#allocation2 + $0x20] sm:$0xf] %vm1000, %v969
        %1010 = vst.msk [vmem:[#allocation2 + $0x24] sm:$0xf] %vm1000, %v971
        %1011 = vst.msk [vmem:[#allocation2 + $0x28] sm:$0xf] %vm1000, %v973
        %1012 = vst.msk [vmem:[#allocation2 + $0x2c] sm:$0xf] %vm1000, %v975
        %1013 = vst.msk [vmem:[#allocation2 + $0x30] sm:$0xf] %vm1000, %v977
        %1014 = vst.msk [vmem:[#allocation2 + $0x34] sm:$0xf] %vm1000, %v979
        %1015 = vst.msk [vmem:[#allocation2 + $0x38] sm:$0xf] %vm1000, %v981
        %1016 = vst.msk [vmem:[#allocation2 + $0x3c] sm:$0xf] %vm1000, %v983
        %v1018 = vshrl.u32 %v293, 16
        %v1020 = vrot.slane %v1018, 4
        %v1021 = vshll.u32 %v293, 16
        %v1023 = vrot.slane %v1021, 5
        %v1024 = vor.u32 %v1020, %v1023
        %v1025 = vrot.slane %v1024, 4
        %v1027 = vshll.u32 %v294, 16
        %v1029 = vrot.slane %v1027, 5
        %v1030 = vsel %vm315, %v1025, %v1029
        %v1031 = vshrl.u32 %v294, 16
        %v1033 = vrot.slane %v1031, 4
        %v1034 = vor.u32 %v1033, %v1029
        %v1035 = vrot.slane %v1034, 4
        %v1037 = vshll.u32 %v295, 16
        %v1039 = vrot.slane %v1037, 5
        %v1040 = vsel %vm315, %v1035, %v1039
        %1041 = vrot.lane.b32.xlu0 %v377, 28
        %v1042 = vpop.permute.xlu0 %1041
        %1043 = vrot.lane.b32.xlu0 %v387, 28
        %v1044 = vpop.permute.xlu0 %1043
        %1045 = vrot.lane.b32.xlu0 %v401, 28
        %v1046 = vpop.permute.xlu0 %1045
        %1047 = vrot.lane.b32.xlu0 %v411, 28
        %v1048 = vpop.permute.xlu0 %1047
        %1049 = vrot.lane.b32.xlu0 %v425, 28
        %v1050 = vpop.permute.xlu0 %1049
        %1051 = vrot.lane.b32.xlu0 %v435, 28
        %v1052 = vpop.permute.xlu0 %1051
        %1053 = vrot.lane.b32.xlu0 %v449, 28
        %v1054 = vpop.permute.xlu0 %1053
        %1055 = vrot.lane.b32.xlu0 %v459, 28
        %v1056 = vpop.permute.xlu0 %1055
        %1057 = vrot.lane.b32.xlu0 %v473, 28
        %v1058 = vpop.permute.xlu0 %1057
        %1059 = vrot.lane.b32.xlu0 %v483, 28
        %v1060 = vpop.permute.xlu0 %1059
        %1061 = vrot.lane.b32.xlu0 %v497, 28
        %v1062 = vpop.permute.xlu0 %1061
        %1063 = vrot.lane.b32.xlu0 %v507, 28
        %v1064 = vpop.permute.xlu0 %1063
        %1065 = vrot.lane.b32.xlu0 %v801, 28
        %v1066 = vpop.permute.xlu0 %1065
        %1067 = vrot.lane.b32.xlu0 %v811, 28
        %v1068 = vpop.permute.xlu0 %1067
        %1069 = vrot.lane.b32.xlu0 %v1030, 28
        %v1070 = vpop.permute.xlu0 %1069
        %1071 = vrot.lane.b32.xlu0 %v1040, 28
        %v1072 = vpop.permute.xlu0 %1071
        %vm1089 = vcmask 257248
        %1090 = vst.msk [vmem:[#allocation2] sm:$0xf] %vm1089, %v1042
        %1091 = vst.msk [vmem:[#allocation2 + $0x4] sm:$0xf] %vm1089, %v1044
        %1092 = vst.msk [vmem:[#allocation2 + $0x8] sm:$0xf] %vm1089, %v1046
        %1093 = vst.msk [vmem:[#allocation2 + $0xc] sm:$0xf] %vm1089, %v1048
        %1094 = vst.msk [vmem:[#allocation2 + $0x10] sm:$0xf] %vm1089, %v1050
        %1095 = vst.msk [vmem:[#allocation2 + $0x14] sm:$0xf] %vm1089, %v1052
        %1096 = vst.msk [vmem:[#allocation2 + $0x18] sm:$0xf] %vm1089, %v1054
        %1097 = vst.msk [vmem:[#allocation2 + $0x1c] sm:$0xf] %vm1089, %v1056
        %1098 = vst.msk [vmem:[#allocation2 + $0x20] sm:$0xf] %vm1089, %v1058
        %1099 = vst.msk [vmem:[#allocation2 + $0x24] sm:$0xf] %vm1089, %v1060
        %1100 = vst.msk [vmem:[#allocation2 + $0x28] sm:$0xf] %vm1089, %v1062
        %1101 = vst.msk [vmem:[#allocation2 + $0x2c] sm:$0xf] %vm1089, %v1064
        %1102 = vst.msk [vmem:[#allocation2 + $0x30] sm:$0xf] %vm1089, %v1066
        %1103 = vst.msk [vmem:[#allocation2 + $0x34] sm:$0xf] %vm1089, %v1068
        %1104 = vst.msk [vmem:[#allocation2 + $0x38] sm:$0xf] %vm1089, %v1070
        %1105 = vst.msk [vmem:[#allocation2 + $0x3c] sm:$0xf] %vm1089, %v1072
        %v1107 = vrot.slane %v293, 5
        %v1108 = vrot.slane %v1107, 4
        %v1109 = vrot.slane %v294, 5
        %v1110 = vsel %vm599, %v1108, %v1109
        %v1111 = vrot.slane %v1109, 4
        %v1112 = vrot.slane %v295, 5
        %v1113 = vsel %vm599, %v1111, %v1112
        %1114 = vrot.lane.b32.xlu0 %v617, 32
        %v1115 = vpop.permute.xlu0 %1114
        %1116 = vrot.lane.b32.xlu0 %v620, 32
        %v1117 = vpop.permute.xlu0 %1116
        %1118 = vrot.lane.b32.xlu0 %v624, 32
        %v1119 = vpop.permute.xlu0 %1118
        %1120 = vrot.lane.b32.xlu0 %v627, 32
        %v1121 = vpop.permute.xlu0 %1120
        %1122 = vrot.lane.b32.xlu0 %v631, 32
        %v1123 = vpop.permute.xlu0 %1122
        %1124 = vrot.lane.b32.xlu0 %v634, 32
        %v1125 = vpop.permute.xlu0 %1124
        %1126 = vrot.lane.b32.xlu0 %v638, 32
        %v1127 = vpop.permute.xlu0 %1126
        %1128 = vrot.lane.b32.xlu0 %v641, 32
        %v1129 = vpop.permute.xlu0 %1128
        %1130 = vrot.lane.b32.xlu0 %v645, 32
        %v1131 = vpop.permute.xlu0 %1130
        %1132 = vrot.lane.b32.xlu0 %v648, 32
        %v1133 = vpop.permute.xlu0 %1132
        %1134 = vrot.lane.b32.xlu0 %v652, 32
        %v1135 = vpop.permute.xlu0 %1134
        %1136 = vrot.lane.b32.xlu0 %v655, 32
        %v1137 = vpop.permute.xlu0 %1136
        %1138 = vrot.lane.b32.xlu0 %v881, 32
        %v1139 = vpop.permute.xlu0 %1138
        %1140 = vrot.lane.b32.xlu0 %v884, 32
        %v1141 = vpop.permute.xlu0 %1140
        %1142 = vrot.lane.b32.xlu0 %v1110, 32
        %v1143 = vpop.permute.xlu0 %1142
        %1144 = vrot.lane.b32.xlu0 %v1113, 32
        %v1145 = vpop.permute.xlu0 %1144
        %vm1162 = vcmask 290048
        %1163 = vst.msk [vmem:[#allocation2] sm:$0xf] %vm1162, %v1115
        %1164 = vst.msk [vmem:[#allocation2 + $0x4] sm:$0xf] %vm1162, %v1117
        %1165 = vst.msk [vmem:[#allocation2 + $0x8] sm:$0xf] %vm1162, %v1119
        %1166 = vst.msk [vmem:[#allocation2 + $0xc] sm:$0xf] %vm1162, %v1121
        %1167 = vst.msk [vmem:[#allocation2 + $0x10] sm:$0xf] %vm1162, %v1123
        %1168 = vst.msk [vmem:[#allocation2 + $0x14] sm:$0xf] %vm1162, %v1125
        %1169 = vst.msk [vmem:[#allocation2 + $0x18] sm:$0xf] %vm1162, %v1127
        %1170 = vst.msk [vmem:[#allocation2 + $0x1c] sm:$0xf] %vm1162, %v1129
        %1171 = vst.msk [vmem:[#allocation2 + $0x20] sm:$0xf] %vm1162, %v1131
        %1172 = vst.msk [vmem:[#allocation2 + $0x24] sm:$0xf] %vm1162, %v1133
        %1173 = vst.msk [vmem:[#allocation2 + $0x28] sm:$0xf] %vm1162, %v1135
        %1174 = vst.msk [vmem:[#allocation2 + $0x2c] sm:$0xf] %vm1162, %v1137
        %1175 = vst.msk [vmem:[#allocation2 + $0x30] sm:$0xf] %vm1162, %v1139
        %1176 = vst.msk [vmem:[#allocation2 + $0x34] sm:$0xf] %vm1162, %v1141
        %1177 = vst.msk [vmem:[#allocation2 + $0x38] sm:$0xf] %vm1162, %v1143
        %1178 = vst.msk [vmem:[#allocation2 + $0x3c] sm:$0xf] %vm1162, %v1145
        %v1179 = vld [vmem:[#allocation2] sm:$0xf]
        %v1180 = vld [vmem:[#allocation2 + $0x4] sm:$0xf]
        %v1181 = vld [vmem:[#allocation2 + $0x8] sm:$0xf]
        %v1182 = vld [vmem:[#allocation2 + $0xc] sm:$0xf]
        %v1183 = vld [vmem:[#allocation2 + $0x10] sm:$0xf]
        %v1184 = vld [vmem:[#allocation2 + $0x14] sm:$0xf]
        %v1185 = vld [vmem:[#allocation2 + $0x18] sm:$0xf]
        %v1186 = vld [vmem:[#allocation2 + $0x1c] sm:$0xf]
        %v1187 = vld [vmem:[#allocation2 + $0x20] sm:$0xf]
        %v1188 = vld [vmem:[#allocation2 + $0x24] sm:$0xf]
        %v1189 = vld [vmem:[#allocation2 + $0x28] sm:$0xf]
        %v1190 = vld [vmem:[#allocation2 + $0x2c] sm:$0xf]
        %v1191 = vld [vmem:[#allocation2 + $0x30] sm:$0xf]
        %v1192 = vld [vmem:[#allocation2 + $0x34] sm:$0xf]
        %v1193 = vld [vmem:[#allocation2 + $0x38] sm:$0xf]
        %v1194 = vld [vmem:[#allocation2 + $0x3c] sm:$0xf]
        %v1195 = vld [vmem:[%s1] sm:$0xf]
        %v1212 = vunpack.c.l.b16 %v1179
        %v1213 = vunpack.c.l.b16 %v1180
        %v1214 = vunpack.c.l.b16 %v1181
        %v1215 = vunpack.c.l.b16 %v1182
        %v1216 = vunpack.c.l.b16 %v1183
        %v1217 = vunpack.c.l.b16 %v1184
        %v1218 = vunpack.c.l.b16 %v1185
        %v1219 = vunpack.c.l.b16 %v1186
        %v1220 = vunpack.c.l.b16 %v1187
        %v1221 = vunpack.c.l.b16 %v1188
        %v1222 = vunpack.c.l.b16 %v1189
        %v1223 = vunpack.c.l.b16 %v1190
        %v1224 = vunpack.c.l.b16 %v1191
        %v1225 = vunpack.c.l.b16 %v1192
        %v1226 = vunpack.c.l.b16 %v1193
        %v1227 = vunpack.c.l.b16 %v1194
        %v1228 = vpack.c.b16 %v1213, %v1212
        %v1229 = vpack.c.b16 %v1215, %v1214
        %v1230 = vpack.c.b16 %v1217, %v1216
        %v1231 = vpack.c.b16 %v1219, %v1218
        %v1232 = vpack.c.b16 %v1221, %v1220
        %v1233 = vpack.c.b16 %v1223, %v1222
        %v1234 = vpack.c.b16 %v1225, %v1224
        %v1235 = vpack.c.b16 %v1227, %v1226
        %vm1236 = vcmask 293888
        %v1238 = vsel %vm1236, %v1195, 0
        %v1241 = vsel %vm1236, %v1228, 0
        %v1244 = vsel %vm1236, %v1229, 0
        %v1247 = vsel %vm1236, %v1230, 0
        %v1250 = vsel %vm1236, %v1231, 0
        %v1253 = vsel %vm1236, %v1232, 0
        %v1256 = vsel %vm1236, %v1233, 0
        %v1259 = vsel %vm1236, %v1234, 0
        %v1262 = vsel %vm1236, %v1235, 0
        %1264 = vmatprep.subr.bf16.mxu0 0
        %1265 = vmatpush1.bf16.xpose.msra.mxu0 %v1262
        %1266 = vmatprep.subr.bf16.mxu0 0
        %1267 = vmatpush1.bf16.xpose.msra.mxu0 %v1259
        %1268 = vmatprep.subr.bf16.mxu0 0
        %1269 = vmatpush1.bf16.xpose.msra.mxu0 %v1256
        %1270 = vmatprep.subr.bf16.mxu0 0
        %1271 = vmatpush1.bf16.xpose.msra.mxu0 %v1253
        %1272 = vmatprep.subr.bf16.mxu0 0
        %1273 = vmatpush1.bf16.xpose.msra.mxu0 %v1250
        %1274 = vmatprep.subr.bf16.mxu0 0
        %1275 = vmatpush1.bf16.xpose.msra.mxu0 %v1247
        %1276 = vmatprep.subr.bf16.mxu0 0
        %1277 = vmatpush1.bf16.xpose.msra.mxu0 %v1244
        %1278 = vmatprep.subr.bf16.mxu0 0
        %1279 = vmatpush1.bf16.xpose.msra.mxu0 %v1241
        %1280 = vmatprep.subr.bf16.mxu0 0
        %1281 = vmatpush2.bf16.xpose.msra.mxu0 0
        %1282 = vmatprep.subr.bf16.mxu0 0
        %1283 = vmatpush2.bf16.xpose.msra.mxu0 0
        %1284 = vmatprep.subr.bf16.mxu0 0
        %1285 = vmatpush2.bf16.xpose.msra.mxu0 0
        %1286 = vmatprep.subr.bf16.mxu0 0
        %1287 = vmatpush2.bf16.xpose.msra.mxu0 0
        %1288 = vmatprep.subr.bf16.mxu0 0
        %1289 = vmatpush2.bf16.xpose.msra.mxu0 0
        %1290 = vmatprep.subr.bf16.mxu0 0
        %1291 = vmatpush2.bf16.xpose.msra.mxu0 0
        %1292 = vmatprep.subr.bf16.mxu0 0
        %1293 = vmatpush2.bf16.xpose.msra.mxu0 0
        %1294 = vmatprep.subr.bf16.mxu0 0
        %1295 = vmatpush2.bf16.xpose.msra.mxu0 0
        %1296 = vmatprep.mubr.bf16.mxu0 0
        %1297 = vmatmul.mubr.bf16.gmra.mxu0 %v1238
        %v1298 = vpop.f32.mrf.mxu0
        %v1299 = vadd.f32 0.0, %v1298
        %v1300 = vpop.f32.mrf.mxu0
        %v1301 = vpop.f32.mrf.mxu0
        %v1302 = vpop.f32.mrf.mxu0
        %1303 = vdwg.mxu0
        %v1304 = vpack.c.bf16 %v1299, %v1299
        %1305 = vst [vmem:[%s219] sm:$0xf] %v1304
        %1306 = vadd.xlane.f32.xlu0 %v1299
        %v1307 = vpop.xlane.xlu0 %1306
        %vm1308 = vcmask 7168
        %1309 = vst.msk [vmem:[%s256] sm:$0xff] %vm1308, %v1307
        %v1310 = vmul.f32 %v1299, %v1299
        %1311 = vadd.xlane.f32.xlu0 %v1310
        %v1312 = vpop.xlane.xlu0 %1311
        %1313 = vst.msk [vmem:[%s264] sm:$0xff] %vm1308, %v1312
        %s1314 = sand.u32 %s90, 1
        %s1315 = scalar_lea.sflag [#allocation4], %s1314
        %s1316 = sand.u32 %s90, 1
        %s1317 = smul.addr %s1316, 4
        %s1318 = scalar_lea.vmem [#allocation3], %s1317
        %p1319 = scmp.lt.s32.totalorder %s23, 1
        %s1320 = scalar_select %p1319, %s23, 1
        %p1321 = scmp.lt.s32.totalorder %s24, 1
        %s1322 = scalar_select %p1321, %s24, 1
        %s1323 = smul.addr %s1320, 2
        %s1324 = sadd.s32 %s1322, %s1323
        %s1325 = smul.addr %s1324, 8
        %s1326 = scalar_lea.vmem %s3, %s1325
        %p1327 = scmp.lt.s32.totalorder %s23, 1
        %s1328 = scalar_select %p1327, %s23, 1
        %p1329 = scmp.lt.s32.totalorder %s24, 1
        %s1330 = scalar_select %p1329, %s24, 1
        %s1331 = smul.addr %s1328, 2
        %s1332 = sadd.s32 %s1330, %s1331
        %s1333 = smul.addr %s1332, 8
        %s1334 = scalar_lea.vmem %s4, %s1333
        // Predicated region
        $region29: #{tpu_custom_call.1} parent=27 // pred_check
          %p1335 = pneg %p100
        $region30: #{tpu_custom_call.1} parent=27 // pred_check_branch
          %1337 = sbr.rel (%p1335) target = $region32
        $region31: #{tpu_custom_call.1} parent=27 // pred_region
          %s1339 = ssub.s32 64, 64
          %1340 = vsyncadd %s1315, %s1339
          %s1341 = smul.addr %s23, 2
          %s1342 = sadd.s32 %s24, %s1341
          %s1343 = smul.addr %s1342, 64
          %s1344 = scalar_lea.hbm %s2, %s1343
          %s1346 = sshll.u32 %s1318, 4
          %s1347 = int_to_ptr.vmem [resolvable:$true] %s1346
          %1349 = dma.vmem_to_hbm [thread:$0]  %s1347, 64, %s1344, %s1315
        $region32: #{tpu_custom_call.1} parent=27 // pred_fallthru
          _
        // Predicated region
        $region33: #{tpu_custom_call.1} parent=27 // pred_check
          %p1350 = pneg %p128
        $region34: #{tpu_custom_call.1} parent=27 // pred_check_branch
          %1352 = sbr.rel (%p1350) target = $region36
        $region35: #{tpu_custom_call.1} parent=27 // pred_region
          _
        $region36: #{tpu_custom_call.1} parent=27 // pred_fallthru
          _
        // Predicated region
        $region37: #{tpu_custom_call.1} parent=27 // pred_check
          %p1353 = pneg %p156
        $region38: #{tpu_custom_call.1} parent=27 // pred_check_branch
          %1355 = sbr.rel (%p1353) target = $region40
        $region39: #{tpu_custom_call.1} parent=27 // pred_region
          _
        $region40: #{tpu_custom_call.1} parent=27 // pred_fallthru
          _
      $region28: #{tpu_custom_call.1} parent=5 // pred_fallthru
        _
      %p1356 = scmp.le.s32.totalorder 2, %s14
      // Predicated region
      $region41: #{tpu_custom_call.1} parent=5 // pred_check
        %p1357 = pneg %p1356
      $region42: #{tpu_custom_call.1} parent=5 // pred_check_branch
        %1359 = sbr.rel (%p1357) target = $region44
      $region43: #{tpu_custom_call.1} parent=5 // pred_region
        %s1360 = ssub.s32 %s14, 2
        // Predicated region
        $region45: #{tpu_custom_call.1} parent=43 // pred_check
          %p1361 = pneg %p106
        $region46: #{tpu_custom_call.1} parent=43 // pred_check_branch
          %1363 = sbr.rel (%p1361) target = $region48
        $region47: #{tpu_custom_call.1} parent=43 // pred_region
          %s1364 = sand.u32 %s91, 1
          %s1365 = scalar_lea.sflag [#allocation4], %s1364
          %s1366 = sand.u32 %s91, 1
          %s1367 = smul.addr %s1366, 4
          %s1368 = scalar_lea.vmem [#allocation3], %s1367
          %1369 = dma.done %s1365, 64
        $region48: #{tpu_custom_call.1} parent=43 // pred_fallthru
          _
        // Predicated region
        $region49: #{tpu_custom_call.1} parent=43 // pred_check
          %p1370 = pneg %p134
        $region50: #{tpu_custom_call.1} parent=43 // pred_check_branch
          %1372 = sbr.rel (%p1370) target = $region52
        $region51: #{tpu_custom_call.1} parent=43 // pred_region
          %p1373 = scmp.lt.s32.totalorder %s25, 1
          %s1374 = scalar_select %p1373, %s25, 1
          %p1375 = scmp.lt.s32.totalorder %s26, 1
          %s1376 = scalar_select %p1375, %s26, 1
          %s1377 = smul.addr %s1374, 2
          %s1378 = sadd.s32 %s1376, %s1377
          %s1379 = smul.addr %s1378, 8
          %s1380 = scalar_lea.vmem %s3, %s1379
        $region52: #{tpu_custom_call.1} parent=43 // pred_fallthru
          _
        // Predicated region
        $region53: #{tpu_custom_call.1} parent=43 // pred_check
          %p1381 = pneg %p162
        $region54: #{tpu_custom_call.1} parent=43 // pred_check_branch
          %1383 = sbr.rel (%p1381) target = $region56
        $region55: #{tpu_custom_call.1} parent=43 // pred_region
          %p1384 = scmp.lt.s32.totalorder %s25, 1
          %s1385 = scalar_select %p1384, %s25, 1
          %p1386 = scmp.lt.s32.totalorder %s26, 1
          %s1387 = scalar_select %p1386, %s26, 1
          %s1388 = smul.addr %s1385, 2
          %s1389 = sadd.s32 %s1387, %s1388
          %s1390 = smul.addr %s1389, 8
          %s1391 = scalar_lea.vmem %s4, %s1390
        $region56: #{tpu_custom_call.1} parent=43 // pred_fallthru
          _
      $region44: #{tpu_custom_call.1} parent=5 // pred_fallthru
        _
    $region6: #{tpu_custom_call.1} parent=1 // loop_footer
      %s18 = sadd.s32 1, %s14
    $region7: #{tpu_custom_call.1} parent=1 // loop_footer_branch
      %13 = sbr.rel target = $region3
    $region8: #{tpu_custom_call.1} parent=1 // loop_exit
      _
    %1392 = vsyncpa [#allocation4], 1
    %s1393 = scalar_lea.sflag [#allocation4], 1
    %1394 = vsyncpa %s1393, 1

</llo_original>
